<compile_context>
chip_gen: v6e
topology: v6e:2x2x1
jax: 0.10.0
libtpu: 0.0.40
codegen_flags: <defaults>
</compile_context>

<pallas_src>
import functools

import jax
import jax.numpy as jnp
from jax.experimental import pallas as pl
from jax.experimental.pallas import tpu as pltpu


def _l1_masked_kernel(len_ref, x_ref, y_ref, out_ref, acc_ref, *,
                      seq_len_norm: bool, feat_dim: int, batch: int,
                      tile_cols: int):
    i = pl.program_id(0)

    @pl.when(i == 0)
    def _():
        acc_ref[...] = jnp.zeros_like(acc_ref)

    # Global column index (into the flattened T*D axis) of every element in
    # this tile.  t < length  <=>  t*D + d < length*D  (since 0 <= d < D), so
    # compare directly against length*D -- no integer division.  Columns past
    # the real array end (tail padding) satisfy col >= T*D >= length*D and are
    # therefore masked off automatically; jnp.where keeps any garbage/NaN in
    # the padded region from propagating.
    col = jax.lax.broadcasted_iota(jnp.int32, x_ref.shape, 1) + i * tile_cols
    limit = len_ref[...] * feat_dim                     # (B, 1) int32
    mask = col < limit                                  # (B, tile_cols) bool

    diff = jnp.where(mask, jnp.abs(x_ref[...] - y_ref[...]), 0.0)
    acc_ref[...] += diff                                # pure VPU, per-lane

    @pl.when(i == pl.num_programs(0) - 1)
    def _():
        len_f = len_ref[...].astype(jnp.float32)        # (B, 1)
        if seq_len_norm:
            # mask / mask.sum(dim=1) / (B*D) applied per element is equivalent
            # to dividing the per-batch masked sums by length_b * B * D.
            # (A zero-length sequence yields inf/NaN, same as the reference.)
            row = jnp.sum(acc_ref[...], axis=1, keepdims=True)   # (B, 1)
            den = len_f * float(batch * feat_dim)
            out_ref[0, 0] = jnp.sum(row / den)
        else:
            # mask.expand_as(x).sum() == D * sum(length)
            total = jnp.sum(len_f) * float(feat_dim)
            out_ref[0, 0] = jnp.sum(acc_ref[...]) / total


def _choose_tile_cols(batch: int, total_cols: int,
                      target_block_bytes: int) -> int:
    # Columns per tile: a multiple of 128 (lane width), sized so one
    # (B, tile_cols) f32 block is ~target_block_bytes, but never wider than
    # the (128-rounded) full column extent.
    cols = max(128, (target_block_bytes // (4 * batch)) // 128 * 128)
    full = pl.cdiv(total_cols, 128) * 128
    return min(cols, full)


def l1_loss_masked(x, target, length, *, seq_len_norm: bool,
                   target_block_bytes: int = 2 << 20):
    B, T, D = x.shape
    total_cols = T * D

    # Lane-dense view: fold T and D so the last (lane) axis is long.
    x2 = x.reshape(B, total_cols)
    y2 = target.reshape(B, total_cols)
    len2 = length.astype(jnp.int32).reshape(B, 1)

    tile_cols = _choose_tile_cols(B, total_cols, target_block_bytes)
    grid = (pl.cdiv(total_cols, tile_cols),)

    kernel = functools.partial(
        _l1_masked_kernel, seq_len_norm=seq_len_norm, feat_dim=D,
        batch=B, tile_cols=tile_cols)

    cost = pl.CostEstimate(
        flops=4 * B * T * D,                 # sub, abs, select, add per elem
        transcendentals=0,
        bytes_accessed=2 * B * T * D * 4 + B * 4 + 4)

    out = pl.pallas_call(
        kernel,
        out_shape=jax.ShapeDtypeStruct((1, 1), jnp.float32),
        grid_spec=pltpu.PrefetchScalarGridSpec(
            num_scalar_prefetch=0,
            grid=grid,
            in_specs=[
                pl.BlockSpec((B, 1), lambda i: (0, 0)),          # lengths
                pl.BlockSpec((B, tile_cols), lambda i: (0, i)),  # x tile
                pl.BlockSpec((B, tile_cols), lambda i: (0, i)),  # target tile
            ],
            out_specs=pl.BlockSpec(memory_space=pltpu.SMEM),
            scratch_shapes=[pltpu.VMEM((B, tile_cols), jnp.float32)],
        ),
        compiler_params=pltpu.CompilerParams(
            dimension_semantics=("arbitrary",),
            vmem_limit_bytes=32 * 1024 * 1024),
        cost_estimate=cost,
    )(len2, x2, y2)
    return out[0, 0]


def _reference(x, target, length, seq_len_norm):
    B, T, D = x.shape
    mask = (jnp.arange(T)[None, :] < length[:, None]).astype(jnp.float32)
    mask = mask[:, :, None]                                   # (B, T, 1)
    if seq_len_norm:
        norm_w = mask / jnp.sum(mask, axis=1, keepdims=True)
        out_w = norm_w / (B * D)
        loss = jnp.abs(x * mask - target * mask)
        return jnp.sum(loss * out_w)
    mask_e = jnp.broadcast_to(mask, x.shape)
    loss = jnp.sum(jnp.abs(x * mask_e - target * mask_e))
    return loss / jnp.sum(mask_e)


if __name__ == "__main__":
    key = jax.random.PRNGKey(0)
    ok = True

    # (B, T, D, lengths, target_block_bytes)
    test_cases = [
        (2, 16, 32, [16, 9], 2 << 20),   # single tile (T*D = 512)
        (2, 40, 80, [37, 12], 4096),     # multi-tile + partial last block
        (2, 13, 40, [13, 7], 1024),      # T*D not a multiple of 128
    ]
    for (B, T, D, lens, blk) in test_cases:
        kx, kt, key = jax.random.split(key, 3)
        x = jax.random.normal(kx, (B, T, D), dtype=jnp.float32)
        target = jax.random.normal(kt, (B, T, D), dtype=jnp.float32)
        length = jnp.array(lens, dtype=jnp.int32)
        for seq_len_norm in (False, True):
            got = jax.block_until_ready(
                l1_loss_masked(x, target, length, seq_len_norm=seq_len_norm,
                               target_block_bytes=blk))
            want = _reference(x, target, length, seq_len_norm)
            if not jnp.allclose(got, want, rtol=2e-5, atol=1e-6):
                ok = False
                print(f"MISMATCH B={B} T={T} D={D} "
                      f"seq_len_norm={seq_len_norm}: {got} vs {want}")

    if ok:
        print("KERNEL_OK")
</pallas_src>

<mosaic_0001>
module attributes {stable_mosaic.version = 11 : i64} {
  func.func @_l1_masked_kernel(%arg0: i32, %arg1: memref<2x1xi32, #tpu.memory_space<vmem>>, %arg2: memref<2x512xf32, #tpu.memory_space<vmem>>, %arg3: memref<2x512xf32, #tpu.memory_space<vmem>>, %arg4: memref<1x1xf32, #tpu.memory_space<smem>>, %arg5: memref<2x512xf32, #tpu.memory_space<vmem>>) attributes {dimension_semantics = [#tpu.dimension_semantics<arbitrary>], iteration_bounds = array<i64: 1>, scalar_prefetch = 0 : i64, scratch_operands = 1 : i64, tpu.core_type = #tpu.core_type<tc>, window_params = [{pipeline_mode = #tpu.pipeline_mode<synchronous>, transform_indices = @transform_0, window_bounds = array<i64: 2, 1>}, {transform_indices = @transform_1, window_bounds = array<i64: 2, 512>}, {transform_indices = @transform_2, window_bounds = array<i64: 2, 512>}, {transform_indices = @transform_3, window_bounds = array<i64: 1, 1>}]} {
    %c0_i32 = arith.constant 0 : i32
    %0 = arith.cmpi eq, %arg0, %c0_i32 : i32
    %1 = arith.extui %0 : i1 to i32
    %c0_i32_0 = arith.constant 0 : i32
    %2 = arith.cmpi ne, %1, %c0_i32_0 : i32
    scf.if %2 {
      %cst_12 = arith.constant 0.000000e+00 : f32
      %24 = vector.broadcast %cst_12 : f32 to vector<2x512xf32>
      %c0_13 = arith.constant 0 : index
      %c0_14 = arith.constant 0 : index
      %25 = vector.load %arg5[%c0_13, %c0_14] : memref<2x512xf32, #tpu.memory_space<vmem>>, vector<2x512xf32>
      tpu.vector_store %arg5[%c0_13, %c0_14], %24 {strides = array<i32>} : memref<2x512xf32, #tpu.memory_space<vmem>>, vector<2x512xf32>,
    } else {
    }
    %3 = tpu.iota {dimensions = array<i32: 1>} : vector<2x512xi32>
    %c512_i32 = arith.constant 512 : i32
    %4 = arith.muli %arg0, %c512_i32 : i32
    %5 = vector.broadcast %4 : i32 to vector<2x512xi32>
    %6 = arith.addi %3, %5 : vector<2x512xi32>
    %c0 = arith.constant 0 : index
    %c0_1 = arith.constant 0 : index
    %7 = vector.load %arg1[%c0, %c0_1] : memref<2x1xi32, #tpu.memory_space<vmem>>, vector<2x1xi32>
    %c32_i32 = arith.constant 32 : i32
    %8 = vector.broadcast %c32_i32 : i32 to vector<2x1xi32>
    %9 = arith.muli %7, %8 : vector<2x1xi32>
    %10 = vector.broadcast %9 : vector<2x1xi32> to vector<2x512xi32>
    %11 = arith.cmpi slt, %6, %10 : vector<2x512xi32>
    %c0_2 = arith.constant 0 : index
    %c0_3 = arith.constant 0 : index
    %12 = vector.load %arg2[%c0_2, %c0_3] : memref<2x512xf32, #tpu.memory_space<vmem>>, vector<2x512xf32>
    %c0_4 = arith.constant 0 : index
    %c0_5 = arith.constant 0 : index
    %13 = vector.load %arg3[%c0_4, %c0_5] : memref<2x512xf32, #tpu.memory_space<vmem>>, vector<2x512xf32>
    %14 = arith.subf %12, %13 : vector<2x512xf32>
    %15 = math.absf %14 : vector<2x512xf32>
    %cst = arith.constant 0.000000e+00 : f32
    %16 = vector.broadcast %cst : f32 to vector<2x512xf32>
    %17 = arith.select %11, %15, %16 : vector<2x512xi1>, vector<2x512xf32>
    %c0_6 = arith.constant 0 : index
    %c0_7 = arith.constant 0 : index
    %18 = vector.load %arg5[%c0_6, %c0_7] : memref<2x512xf32, #tpu.memory_space<vmem>>, vector<2x512xf32>
    %19 = arith.addf %18, %17 : vector<2x512xf32>
    %c0_8 = arith.constant 0 : index
    %c0_9 = arith.constant 0 : index
    %20 = vector.load %arg5[%c0_8, %c0_9] : memref<2x512xf32, #tpu.memory_space<vmem>>, vector<2x512xf32>
    tpu.vector_store %arg5[%c0_8, %c0_9], %19 {strides = array<i32>} : memref<2x512xf32, #tpu.memory_space<vmem>>, vector<2x512xf32>,
    %c0_i32_10 = arith.constant 0 : i32
    %21 = arith.cmpi eq, %arg0, %c0_i32_10 : i32
    %22 = arith.extui %21 : i1 to i32
    %c0_i32_11 = arith.constant 0 : i32
    %23 = arith.cmpi ne, %22, %c0_i32_11 : i32
    scf.if %23 {
      %c0_12 = arith.constant 0 : index
      %c0_13 = arith.constant 0 : index
      %24 = vector.load %arg1[%c0_12, %c0_13] : memref<2x1xi32, #tpu.memory_space<vmem>>, vector<2x1xi32>
      %25 = arith.sitofp %24 : vector<2x1xi32> to vector<2x1xf32>
      %26 = vector.shape_cast %25 : vector<2x1xf32> to vector<1x2x1xf32>
      %cst_14 = arith.constant dense<0.000000e+00> : vector<1xf32>
      %27 = vector.multi_reduction <add>, %26, %cst_14 [1, 2] : vector<1x2x1xf32> to vector<1xf32>
      %28 = vector.shape_cast %27 : vector<1xf32> to vector<1x1x1xf32>
      %29 = vector.extract %28[0, 0, 0] : f32 from vector<1x1x1xf32>
      %cst_15 = arith.constant 3.200000e+01 : f32
      %30 = arith.mulf %29, %cst_15 : f32
      %c0_16 = arith.constant 0 : index
      %c0_17 = arith.constant 0 : index
      %31 = vector.load %arg5[%c0_16, %c0_17] : memref<2x512xf32, #tpu.memory_space<vmem>>, vector<2x512xf32>
      %32 = vector.shape_cast %31 : vector<2x512xf32> to vector<1x2x512xf32>
      %cst_18 = arith.constant dense<0.000000e+00> : vector<1xf32>
      %33 = vector.multi_reduction <add>, %32, %cst_18 [1, 2] : vector<1x2x512xf32> to vector<1xf32>
      %34 = vector.shape_cast %33 : vector<1xf32> to vector<1x1x1xf32>
      %35 = vector.extract %34[0, 0, 0] : f32 from vector<1x1x1xf32>
      %36 = arith.divf %35, %30 : f32
      %c0_19 = arith.constant 0 : index
      %c0_20 = arith.constant 0 : index
      %37 = memref.load %arg4[%c0_19, %c0_20] : memref<1x1xf32, #tpu.memory_space<smem>>
      memref.store %36, %arg4[%c0_19, %c0_20] : memref<1x1xf32, #tpu.memory_space<smem>>
    } else {
    }
    return
  }
  func.func @transform_0(%arg0: i32) -> (i32, i32) {
    %c0_i32 = arith.constant 0 : i32
    %c0_i32_0 = arith.constant 0 : i32
    %c0_i32_1 = arith.constant 0 : i32
    return %c0_i32, %c0_i32_0 : i32, i32
  }
  func.func @transform_1(%arg0: i32) -> (i32, i32) {
    %c0_i32 = arith.constant 0 : i32
    %c0_i32_0 = arith.constant 0 : i32
    return %c0_i32, %arg0 : i32, i32
  }
  func.func @transform_2(%arg0: i32) -> (i32, i32) {
    %c0_i32 = arith.constant 0 : i32
    %c0_i32_0 = arith.constant 0 : i32
    return %c0_i32, %arg0 : i32, i32
  }
  func.func @transform_3(%arg0: i32) -> (i32, i32) {
    %c0_i32 = arith.constant 0 : i32
    %c0_i32_0 = arith.constant 0 : i32
    %c0_i32_1 = arith.constant 0 : i32
    return %c0_i32, %c0_i32_0 : i32, i32
  }
}

</mosaic_0001>

<llo_original>
// kernel: tpu_custom_call.1
$region0: #{tpu_custom_call.1}
  #allocation0 [shape = 'u32[]', space=smem, size = 0x4, offset = 0x4, fixed_abs, tag = 'smem constant byte address 0x4 - core index']
  #allocation1 [shape = 'u32[144,128]{1,0:T(1,128)}', space=vmem, size = 0x12000, scoped, tag = 'internal scratch']
  #allocation2 [shape = 'f32[2,512]{1,0:T(2,128)}', space=vmem, size = 0x1000, scoped, tag = 'scratch operand']
  %s0 = inlined_call_operand.vmem [shape: s32[2,1], index: 0, kind: input, shape index: {}]
  %s1 = inlined_call_operand.hbm [shape: f32[2,512], index: 1, kind: input, shape index: {}]
  %s2 = inlined_call_operand.hbm [shape: f32[2,512], index: 2, kind: input, shape index: {}]
  %s3 = inlined_call_operand.hbm [shape: f32[1,1], index: 3, kind: output, shape index: {}]
  %s4 = sld [smem:[#allocation0]]
  $region38: #{tpu_custom_call.1} parent=0
    _
  %s6 = ssub.s32 1, %s4
  %s7 = scalar_select 0, %s6, %s4
  $region1: #{tpu_custom_call.1} parent=0
    #allocation3 [shape = 'u8[4096]{0}', space=vmem, size = 0x1000, scoped, tag = 'input window, operand 1, single buffered']
    #allocation4 [shape = 's32[1]{0}', space=sflag, size = 0x4, scoped, tag = 'scoped memory for tpu_custom_call.1']
    #allocation5 [shape = 's32[1]{0}', space=sflag, size = 0x4, scoped, tag = 'scoped memory for tpu_custom_call.1']
    #allocation6 [shape = 'u8[4096]{0}', space=vmem, size = 0x1000, scoped, tag = 'input window, operand 2, single buffered']
    #allocation7 [shape = 's32[1]{0}', space=sflag, size = 0x4, scoped, tag = 'scoped memory for tpu_custom_call.1']
    #allocation8 [shape = 'u8[512]{0}', space=smem, size = 0x200, scoped, tag = 'output window, operand 0, single buffered']
    %8 = vsyncpa [#allocation4], 0
    %9 = vsyncpa [#allocation7], 0
    %10 = vsyncpa [#allocation5], 0
    // Predicated region
    $region2: #{tpu_custom_call.1} parent=1 // pred_check
      _
    $region3: #{tpu_custom_call.1} parent=1 // pred_check_branch
      %12 = sbr.rel (0) target = $region5
    $region4: #{tpu_custom_call.1} parent=1 // pred_region
      _
    $region5: #{tpu_custom_call.1} parent=1 // pred_fallthru
      _
    // Predicated region
    $region6: #{tpu_custom_call.1} parent=1 // pred_check
      _
    $region7: #{tpu_custom_call.1} parent=1 // pred_check_branch
      %14 = sbr.rel (0) target = $region9
    $region8: #{tpu_custom_call.1} parent=1 // pred_region
      %s16 = ssub.s32 128, 128
      %17 = vsyncadd [#allocation4], %s16
      %s19 = sshll.u32 [#allocation3], 4
      %s20 = int_to_ptr.vmem [resolvable:$true] %s19
      %22 = dma.hbm_to_vmem [thread:$0]  %s1, 128, %s20, [#allocation4]
    $region9: #{tpu_custom_call.1} parent=1 // pred_fallthru
      _
    // Predicated region
    $region10: #{tpu_custom_call.1} parent=1 // pred_check
      _
    $region11: #{tpu_custom_call.1} parent=1 // pred_check_branch
      %24 = sbr.rel (0) target = $region13
    $region12: #{tpu_custom_call.1} parent=1 // pred_region
      %s26 = ssub.s32 128, 128
      %27 = vsyncadd [#allocation7], %s26
      %s29 = sshll.u32 [#allocation6], 4
      %s30 = int_to_ptr.vmem [resolvable:$true] %s29
      %32 = dma.hbm_to_vmem [thread:$0]  %s2, 128, %s30, [#allocation7]
    $region13: #{tpu_custom_call.1} parent=1 // pred_fallthru
      _
    // Predicated region
    $region14: #{tpu_custom_call.1} parent=1 // pred_check
      _
    $region15: #{tpu_custom_call.1} parent=1 // pred_check_branch
      %34 = sbr.rel (0) target = $region17
    $region16: #{tpu_custom_call.1} parent=1 // pred_region
      %35 = dma.done [#allocation4], 128
    $region17: #{tpu_custom_call.1} parent=1 // pred_fallthru
      _
    // Predicated region
    $region18: #{tpu_custom_call.1} parent=1 // pred_check
      _
    $region19: #{tpu_custom_call.1} parent=1 // pred_check_branch
      %37 = sbr.rel (0) target = $region21
    $region20: #{tpu_custom_call.1} parent=1 // pred_region
      %38 = dma.done [#allocation7], 128
    $region21: #{tpu_custom_call.1} parent=1 // pred_fallthru
      _
    %p39 = scmp.eq.s32.totalorder 0, 0
    // Predicated region
    $region22: #{tpu_custom_call.1} parent=1 // pred_check
      %p40 = pneg %p39
    $region23: #{tpu_custom_call.1} parent=1 // pred_check_branch
      %42 = sbr.rel (%p40) target = $region25
    $region24: #{tpu_custom_call.1} parent=1 // pred_region
      %43 = vst [vmem:[#allocation2] sm:$0xff] 0.0
    $region25: #{tpu_custom_call.1} parent=1 // pred_fallthru
      _
    %v44 = vlaneseq
    %v45 = vand.u32 %v44, 127
    %v46 = vadd.s32 %v45, 128
    %v47 = vadd.s32 %v45, 256
    %v48 = vadd.s32 %v45, 384
    %s49 = smul.u32 0, 512
    %v50 = vstv %s49
    %v51 = vadd.s32 %v45, %v50
    %v52 = vadd.s32 %v46, %v50
    %v53 = vadd.s32 %v47, %v50
    %v54 = vadd.s32 %v48, %v50
    %v55 = vld [vmem:[%s0] sm:$0x3]
    %v56 = vmul.u32 %v55, 32
    %57 = vset.pattern.permute.xlu0 0
    %58 = vperm.xlu0 %57, %v56
    %v59 = vpop.permute.xlu0 %58
    %vm60 = vcmp.lt.s32.totalorder %v51, %v59
    %vm61 = vcmp.lt.s32.totalorder %v52, %v59
    %vm62 = vcmp.lt.s32.totalorder %v53, %v59
    %vm63 = vcmp.lt.s32.totalorder %v54, %v59
    %v64 = vld [vmem:[#allocation3] sm:$0xff]
    %v65 = vld [vmem:[#allocation6] sm:$0xff]
    %v66 = vsub.f32 %v64, %v65
    %v67 = vand.u32 2147483647, %v66
    %v69 = vcombine.high %v67, %v67
    %v71 = vunpack.c.l.s4 1983009808
    %v72 = vunpack.c.0.s8 %v71
    %v73 = vlaneseq
    %v74 = vshrl.u32 %v73, 7
    %v75 = vsub.s32 %v72, %v74
    %v76 = vrot.slane %v67, %v75
    %v78 = vunpack.c.l.s4 1983009808
    %v79 = vunpack.c.0.s8 %v78
    %v80 = vlaneseq
    %v81 = vshrl.u32 %v80, 7
    %v82 = vsub.s32 %v79, %v81
    %v83 = vrot.slane %v69, %v82
    %v84 = vcombine.high %v76, %v76
    %v85 = vcombine.high %v83, %v83
    %v90 = vsel %vm60, %v76, 0.0
    %v91 = vsel %vm61, %v84, 0.0
    %v92 = vsel %vm62, %v83, 0.0
    %v93 = vsel %vm63, %v85, 0.0
    %v94 = vld [vmem:[#allocation2] sm:$0xff]
    %v99 = vcombine.low %v90, %v91
    %v100 = vcombine.low %v92, %v93
    %v102 = vunpack.c.l.s4 1983009808
    %v103 = vunpack.c.0.s8 %v102
    %v104 = vlaneseq
    %v105 = vshrl.u32 %v104, 7
    %v106 = vsub.s32 %v103, %v105
    %v107 = vrot.slane %v99, %v106
    %v109 = vunpack.c.l.s4 1983009808
    %v110 = vunpack.c.0.s8 %v109
    %v111 = vlaneseq
    %v112 = vshrl.u32 %v111, 7
    %v113 = vsub.s32 %v110, %v112
    %v114 = vrot.slane %v100, %v113
    %v115 = vcombine.low %v107, %v114
    %v117 = vadd.f32 %v94, %v115
    %118 = vst [vmem:[#allocation2] sm:$0xff] %v117
    // Predicated region
    $region26: #{tpu_custom_call.1} parent=1 // pred_check
      %p119 = pneg %p39
    $region27: #{tpu_custom_call.1} parent=1 // pred_check_branch
      %121 = sbr.rel (%p119) target = $region29
    $region28: #{tpu_custom_call.1} parent=1 // pred_region
      %v122 = vld [vmem:[%s0] sm:$0x3]
      %v123 = vcvt.s32.f32 %v122
      %vm124 = vcmask 1024
      %v125 = vsel %vm124, %v123, 0.0
      %126 = vadd.xlane.f32.xlu0 %v125
      %v127 = vpop.xlane.xlu0 %126
      %v128 = vrot.slane %v127, 4
      %v129 = vadd.f32 %v127, %v128
      %v130 = vrot.slane %v129, 2
      %v131 = vadd.f32 %v129, %v130
      %v132 = vrot.slane %v131, 1
      %v133 = vadd.f32 %v131, %v132
      %s134 = vtos %v133
      %s135 = smul.f32 %s134, 32.0
      %v136 = vld [vmem:[#allocation2] sm:$0xff]
      %v138 = vcombine.high %v136, %v136
      %v140 = vunpack.c.l.s4 1983009808
      %v141 = vunpack.c.0.s8 %v140
      %v142 = vlaneseq
      %v143 = vshrl.u32 %v142, 7
      %v144 = vsub.s32 %v141, %v143
      %v145 = vrot.slane %v136, %v144
      %v147 = vunpack.c.l.s4 1983009808
      %v148 = vunpack.c.0.s8 %v147
      %v149 = vlaneseq
      %v150 = vshrl.u32 %v149, 7
      %v151 = vsub.s32 %v148, %v150
      %v152 = vrot.slane %v138, %v151
      %v153 = vcombine.high %v145, %v145
      %v154 = vcombine.high %v152, %v152
      %vm159 = vcmask 1041408
      %v160 = vsel %vm159, %v145, 0.0
      %v161 = vsel %vm159, %v153, 0.0
      %v162 = vadd.f32 %v160, %v161
      %v163 = vsel %vm159, %v152, 0.0
      %v164 = vadd.f32 %v162, %v163
      %v165 = vsel %vm159, %v154, 0.0
      %v166 = vadd.f32 %v164, %v165
      %167 = vadd.xlane.f32.xlu0 %v166
      %v168 = vpop.xlane.xlu0 %167
      %v169 = vrot.slane %v168, 4
      %v170 = vadd.f32 %v168, %v169
      %v171 = vrot.slane %v170, 2
      %v172 = vadd.f32 %v170, %v171
      %v173 = vrot.slane %v172, 1
      %v174 = vadd.f32 %v172, %v173
      %s175 = vtos %v174
      %v176 = vstv %s135
      %v177 = vrcp.pop %v176
      %s178 = vtos %v177
      %s179 = smul.f32 %s175, %s178
      %s180 = scalar_lea.smem [#allocation8], 0
      %181 = sst [smem:[%s180]] %s179
    $region29: #{tpu_custom_call.1} parent=1 // pred_fallthru
      _
    // Predicated region
    $region30: #{tpu_custom_call.1} parent=1 // pred_check
      _
    $region31: #{tpu_custom_call.1} parent=1 // pred_check_branch
      %183 = sbr.rel (0) target = $region33
    $region32: #{tpu_custom_call.1} parent=1 // pred_region
      %s185 = ssub.s32 16, 16
      %186 = vsyncadd [#allocation5], %s185
      %189 = dma.smem_to_hbm [#allocation8], 16, %s3, [#allocation5]
    $region33: #{tpu_custom_call.1} parent=1 // pred_fallthru
      _
    // Predicated region
    $region34: #{tpu_custom_call.1} parent=1 // pred_check
      _
    $region35: #{tpu_custom_call.1} parent=1 // pred_check_branch
      %191 = sbr.rel (0) target = $region37
    $region36: #{tpu_custom_call.1} parent=1 // pred_region
      %192 = dma.done [#allocation5], 16
    $region37: #{tpu_custom_call.1} parent=1 // pred_fallthru
      _
    %193 = sfence
    %194 = vsyncpa [#allocation4], 1
    %195 = vsyncpa [#allocation7], 1
    %196 = vsyncpa [#allocation5], 1

</llo_original>
